<compile_context>
chip_gen: v6e
topology: v6e:2x2x1
jax: 0.10.0
libtpu: 0.0.40
codegen_flags: <defaults>
</compile_context>

<pallas_src>
import jax
import jax.numpy as jnp
from jax.experimental import pallas as pl
from jax.experimental.pallas import tpu as pltpu


def _attn_kernel(u_ref, c_ref, enc_ref, out_ref):
    # u_ref:   (Bt, H)    precomputed  hidden @ W        (f32)
    # c_ref:   (Bt, 1)    precomputed  hidden . bias     (f32)
    # enc_ref: (Bt, L, H) encoder outputs for this batch tile
    # out_ref: (Bt, L)    softmax-ed attention weights
    u = u_ref[...]                                   # (Bt, H)
    c = c_ref[...]                                   # (Bt, 1)
    enc = enc_ref[...].astype(jnp.float32)           # (Bt, L, H)

    # scores[b, i] = enc[b, i, :] . u[b, :] + c[b]
    # Batched matvec on the MXU (batch dim 0, contract H) -- keeps VPU/XLU free.
    scores = jax.lax.dot_general(
        enc, u,
        dimension_numbers=(((2,), (1,)), ((0,), (0,))),
        preferred_element_type=jnp.float32,
    ) + c                                            # (Bt, L)

    # Row softmax over L in f32 (exact divide: rows must sum to 1 downstream).
    m = jnp.max(scores, axis=-1, keepdims=True)
    e = jnp.exp(scores - m)
    denom = jnp.sum(e, axis=-1, keepdims=True)
    out_ref[...] = (e / denom).astype(out_ref.dtype)


def attn_forward(hidden, encoder_outputs, weight, bias):
    """hidden: (1, B, H), encoder_outputs: (B, L, H) -> (B, 1, L)."""
    _, B, H = hidden.shape
    _, L, _ = encoder_outputs.shape

    hid2d = hidden.reshape(B, H).astype(jnp.float32)

    # Algebraic rewrite:  hid . (enc @ W^T + b) == enc . (hid @ W) + hid . b
    # Hoist the tiny (B,H)x(H,H) projection out of the streaming kernel so W
    # never competes with enc tiles for VMEM (per perf review).
    u = jnp.dot(hid2d, weight.astype(jnp.float32),
                preferred_element_type=jnp.float32)                       # (B, H)
    c = jnp.sum(hid2d * bias.reshape(1, H).astype(jnp.float32),
                axis=-1, keepdims=True)                                   # (B, 1)

    # Batch-tile size: ~12 MiB enc tile (double-buffered it stays well inside
    # v7x's 64 MiB VMEM while amortizing the ~0.35us/step overhead on
    # v5e/v6e/v7x).  bt is always a multiple of 8 (f32 sublane) or == B.
    itemsize = encoder_outputs.dtype.itemsize
    tile_budget = 12 << 20
    rows_per_budget = tile_budget // max(1, L * H * itemsize)
    if rows_per_budget >= B:
        bt = B                                   # whole batch in one tile
    else:
        bt = min(max(8, (rows_per_budget // 8) * 8), B)
    grid = (pl.cdiv(B, bt),)

    enc_tile_bytes = bt * L * H * itemsize
    # Double-buffered enc tile + small u/c/out tiles + headroom; capped so the
    # request never exceeds v7x's 64 MiB physical VMEM (v5e/v6e have 128 MiB).
    vmem_limit = int(min(60 << 20, max(48 << 20, 2 * enc_tile_bytes + (8 << 20))))

    cost = pl.CostEstimate(
        flops=2 * B * L * H,
        transcendentals=B * L,
        bytes_accessed=B * L * H * itemsize + B * H * 4 + B * 4 + B * L * 4,
    )

    out2d = pl.pallas_call(
        _attn_kernel,
        out_shape=jax.ShapeDtypeStruct((B, L), jnp.float32),
        grid_spec=pltpu.PrefetchScalarGridSpec(
            num_scalar_prefetch=0,
            grid=grid,
            in_specs=[
                pl.BlockSpec((bt, H), lambda b: (b, 0)),        # u
                pl.BlockSpec((bt, 1), lambda b: (b, 0)),        # c
                pl.BlockSpec((bt, L, H), lambda b: (b, 0, 0)),  # encoder_outputs
            ],
            out_specs=pl.BlockSpec((bt, L), lambda b: (b, 0)),
        ),
        compiler_params=pltpu.CompilerParams(
            dimension_semantics=("parallel",),
            vmem_limit_bytes=vmem_limit,
        ),
        cost_estimate=cost,
    )(u, c, encoder_outputs)

    # (B, L) -> (B, 1, L) to match the PyTorch output layout.
    return out2d[:, None, :]


def attn_reference(hidden, encoder_outputs, weight, bias):
    # Pure-JAX reference of the PyTorch forward.
    energy = jnp.einsum("blh,oh->blo", encoder_outputs, weight) + bias  # (B, L, H)
    scores = jnp.einsum("bh,blh->bl", hidden[0], energy)                # (B, L)
    return jax.nn.softmax(scores, axis=-1)[:, None, :]                  # (B, 1, L)


if __name__ == "__main__":
    B, L, H = 2, 8, 32
    key = jax.random.PRNGKey(0)
    k1, k2, k3, k4 = jax.random.split(key, 4)

    hidden = jax.random.normal(k1, (1, B, H), dtype=jnp.float32)
    encoder_outputs = jax.random.normal(k2, (B, L, H), dtype=jnp.float32)
    # Deterministic parameter init for nn.Linear(H, H): weight (H, H), bias (H,)
    weight = jax.random.normal(k3, (H, H), dtype=jnp.float32) * (1.0 / jnp.sqrt(H))
    bias = jax.random.normal(k4, (H,), dtype=jnp.float32) * 0.01

    out = attn_forward(hidden, encoder_outputs, weight, bias)
    out = jax.block_until_ready(out)

    ref = attn_reference(hidden, encoder_outputs, weight, bias)
    assert out.shape == (B, 1, L)
    assert jnp.allclose(out, ref, atol=1e-5, rtol=1e-5), "mismatch vs reference"
    assert jnp.allclose(jnp.sum(out, axis=-1), 1.0, atol=1e-5), "softmax rows must sum to 1"

    print("KERNEL_OK")
</pallas_src>

<mosaic_0001>
module attributes {stable_mosaic.version = 11 : i64} {
  func.func @_attn_kernel(%arg0: i32, %arg1: memref<2x32xf32, #tpu.memory_space<vmem>>, %arg2: memref<2x1xf32, #tpu.memory_space<vmem>>, %arg3: memref<2x8x32xf32, #tpu.memory_space<vmem>>, %arg4: memref<2x8xf32, #tpu.memory_space<vmem>>) attributes {dimension_semantics = [#tpu.dimension_semantics<parallel>], iteration_bounds = array<i64: 1>, scalar_prefetch = 0 : i64, scratch_operands = 0 : i64, tpu.core_type = #tpu.core_type<tc>, window_params = [{transform_indices = @transform_0, window_bounds = array<i64: 2, 32>}, {transform_indices = @transform_1, window_bounds = array<i64: 2, 1>}, {transform_indices = @transform_2, window_bounds = array<i64: 2, 8, 32>}, {transform_indices = @transform_3, window_bounds = array<i64: 2, 8>}]} {
    %c0 = arith.constant 0 : index
    %c0_0 = arith.constant 0 : index
    %0 = vector.load %arg1[%c0, %c0_0] : memref<2x32xf32, #tpu.memory_space<vmem>>, vector<2x32xf32>
    %c0_1 = arith.constant 0 : index
    %c0_2 = arith.constant 0 : index
    %1 = vector.load %arg2[%c0_1, %c0_2] : memref<2x1xf32, #tpu.memory_space<vmem>>, vector<2x1xf32>
    %c0_3 = arith.constant 0 : index
    %c0_4 = arith.constant 0 : index
    %c0_5 = arith.constant 0 : index
    %2 = vector.load %arg3[%c0_3, %c0_4, %c0_5] : memref<2x8x32xf32, #tpu.memory_space<vmem>>, vector<2x8x32xf32>
    %cst = arith.constant dense<0.000000e+00> : vector<2x8xf32>
    %3 = tpu.matmul %2, %0, %cst {dimension_numbers = #tpu.dot_dimension_numbers<[2], [1], [1], [], [0, 0, 0, 1], [0], [0]>} : vector<2x8x32xf32>, vector<2x32xf32>, vector<2x8xf32> -> vector<2x8xf32>
    %4 = vector.broadcast %1 : vector<2x1xf32> to vector<2x8xf32>
    %5 = arith.addf %3, %4 : vector<2x8xf32>
    %cst_6 = arith.constant dense<0xFF800000> : vector<2xf32>
    %6 = vector.multi_reduction <maximumf>, %5, %cst_6 [1] : vector<2x8xf32> to vector<2xf32>
    %7 = vector.shape_cast %6 : vector<2xf32> to vector<2x1xf32>
    %8 = vector.broadcast %7 : vector<2x1xf32> to vector<2x8xf32>
    %9 = arith.subf %5, %8 : vector<2x8xf32>
    %10 = math.exp %9 : vector<2x8xf32>
    %cst_7 = arith.constant dense<0.000000e+00> : vector<2xf32>
    %11 = vector.multi_reduction <add>, %10, %cst_7 [1] : vector<2x8xf32> to vector<2xf32>
    %12 = vector.shape_cast %11 : vector<2xf32> to vector<2x1xf32>
    %13 = vector.broadcast %12 : vector<2x1xf32> to vector<2x8xf32>
    %14 = arith.divf %10, %13 : vector<2x8xf32>
    %c0_8 = arith.constant 0 : index
    %c0_9 = arith.constant 0 : index
    %15 = vector.load %arg4[%c0_8, %c0_9] : memref<2x8xf32, #tpu.memory_space<vmem>>, vector<2x8xf32>
    tpu.vector_store %arg4[%c0_8, %c0_9], %14 {strides = array<i32>} : memref<2x8xf32, #tpu.memory_space<vmem>>, vector<2x8xf32>,
    return
  }
  func.func @transform_0(%arg0: i32) -> (i32, i32) {
    %c0_i32 = arith.constant 0 : i32
    %c0_i32_0 = arith.constant 0 : i32
    return %arg0, %c0_i32 : i32, i32
  }
  func.func @transform_1(%arg0: i32) -> (i32, i32) {
    %c0_i32 = arith.constant 0 : i32
    %c0_i32_0 = arith.constant 0 : i32
    return %arg0, %c0_i32 : i32, i32
  }
  func.func @transform_2(%arg0: i32) -> (i32, i32, i32) {
    %c0_i32 = arith.constant 0 : i32
    %c0_i32_0 = arith.constant 0 : i32
    %c0_i32_1 = arith.constant 0 : i32
    return %arg0, %c0_i32, %c0_i32_0 : i32, i32, i32
  }
  func.func @transform_3(%arg0: i32) -> (i32, i32) {
    %c0_i32 = arith.constant 0 : i32
    %c0_i32_0 = arith.constant 0 : i32
    return %arg0, %c0_i32 : i32, i32
  }
}

</mosaic_0001>

<llo_original>
// kernel: tpu_custom_call.1
$region0: #{tpu_custom_call.1}
  #allocation0 [shape = 'u32[]', space=smem, size = 0x4, offset = 0x4, fixed_abs, tag = 'smem constant byte address 0x4 - core index']
  #allocation1 [shape = 'u32[144,128]{1,0:T(1,128)}', space=vmem, size = 0x12000, scoped, tag = 'internal scratch']
  %s0 = inlined_call_operand.vmem [shape: f32[2,32], index: 0, kind: input, shape index: {}]
  %s1 = inlined_call_operand.vmem [shape: f32[2,1], index: 1, kind: input, shape index: {}]
  %s2 = inlined_call_operand.hbm [shape: f32[2,8,32], index: 2, kind: input, shape index: {}]
  %s3 = inlined_call_operand.hbm [shape: f32[2,8], index: 3, kind: output, shape index: {}]
  %s4 = sld [smem:[#allocation0]]
  $region26: #{tpu_custom_call.1} parent=0
    _
  %s6 = ssub.s32 1, %s4
  %s7 = scalar_select 0, %s6, %s4
  $region1: #{tpu_custom_call.1} parent=0
    #allocation2 [shape = 'u8[8192]{0}', space=vmem, size = 0x2000, scoped, tag = 'input window, operand 2, single buffered']
    #allocation3 [shape = 's32[1]{0}', space=sflag, size = 0x4, scoped, tag = 'scoped memory for tpu_custom_call.1']
    #allocation4 [shape = 's32[1]{0}', space=sflag, size = 0x4, scoped, tag = 'scoped memory for tpu_custom_call.1']
    #allocation5 [shape = 'u8[1024]{0}', space=vmem, size = 0x400, scoped, tag = 'output window, operand 0, single buffered']
    %8 = vsyncpa [#allocation3], 0
    %9 = vsyncpa [#allocation4], 0
    // Predicated region
    $region2: #{tpu_custom_call.1} parent=1 // pred_check
      _
    $region3: #{tpu_custom_call.1} parent=1 // pred_check_branch
      %11 = sbr.rel (0) target = $region5
    $region4: #{tpu_custom_call.1} parent=1 // pred_region
      _
    $region5: #{tpu_custom_call.1} parent=1 // pred_fallthru
      _
    // Predicated region
    $region6: #{tpu_custom_call.1} parent=1 // pred_check
      _
    $region7: #{tpu_custom_call.1} parent=1 // pred_check_branch
      %13 = sbr.rel (0) target = $region9
    $region8: #{tpu_custom_call.1} parent=1 // pred_region
      _
    $region9: #{tpu_custom_call.1} parent=1 // pred_fallthru
      _
    // Predicated region
    $region10: #{tpu_custom_call.1} parent=1 // pred_check
      _
    $region11: #{tpu_custom_call.1} parent=1 // pred_check_branch
      %15 = sbr.rel (0) target = $region13
    $region12: #{tpu_custom_call.1} parent=1 // pred_region
      %s17 = ssub.s32 256, 256
      %18 = vsyncadd [#allocation3], %s17
      %s19 = sshll.u32 [#allocation2], 4
      %s20 = int_to_ptr.vmem [resolvable:$true] %s19
      %25 = dma.hbm_to_vmem [thread:$0]  %s2, 256, %s20, [#allocation3], 128, 128, 8
    $region13: #{tpu_custom_call.1} parent=1 // pred_fallthru
      _
    // Predicated region
    $region14: #{tpu_custom_call.1} parent=1 // pred_check
      _
    $region15: #{tpu_custom_call.1} parent=1 // pred_check_branch
      %27 = sbr.rel (0) target = $region17
    $region16: #{tpu_custom_call.1} parent=1 // pred_region
      %28 = dma.done [#allocation3], 256
    $region17: #{tpu_custom_call.1} parent=1 // pred_fallthru
      _
    %v29 = vld [vmem:[%s0] sm:$0x3]
    %v30 = vld [vmem:[%s1] sm:$0x3]
    %v31 = vld [vmem:[#allocation2] sm:$0xff]
    %v32 = vld [vmem:[#allocation2 + $0x8] sm:$0xff]
    %34 = vset.pattern.permute.xlu0 0
    %35 = vperm.xlu0 %34, %v30
    %v36 = vpop.permute.xlu0 %35
    %v37 = vlaneseq
    %v38 = vshrl.u32 %v37, 7
    %v39 = vsub.s32 0, %v38
    %v40 = vrot.slane %v29, %v39
    %v41 = vmul.f32 %v31, %v40
    %v42 = vlaneseq
    %v43 = vshrl.u32 %v42, 7
    %v44 = vsub.s32 0, %v43
    %v45 = vrot.slane %v36, %v44
    %vm47 = vcmask 261120
    %v48 = vsel %vm47, %v41, 0.0
    %49 = vadd.xlane.f32.xlu0 %v48
    %v50 = vpop.xlane.xlu0 %49
    %v51 = vadd.f32 %v50, %v45
    %v52 = vlaneseq
    %v53 = vshrl.u32 %v52, 7
    %v54 = vsub.s32 1, %v53
    %v55 = vrot.slane %v29, %v54
    %v56 = vmul.f32 %v32, %v55
    %v57 = vlaneseq
    %v58 = vshrl.u32 %v57, 7
    %v59 = vsub.s32 1, %v58
    %v60 = vrot.slane %v36, %v59
    %v62 = vsel %vm47, %v56, 0.0
    %63 = vadd.xlane.f32.xlu0 %v62
    %v64 = vpop.xlane.xlu0 %63
    %v65 = vadd.f32 %v64, %v60
    %v67 = vlaneseq
    %v68 = vand.u32 %v67, 127
    %v69 = vlaneseq
    %v70 = vshrl.u32 %v69, 7
    %v71 = vsub.s32 %v68, %v70
    %v72 = vrot.slane %v51, %v71
    %v75 = vlaneseq
    %v76 = vshrl.u32 %v75, 7
    %v77 = vsub.s32 %v68, %v76
    %v78 = vrot.slane %v65, %v77
    %vm80 = vcmask 1040384
    %v81 = vsel %vm80, %v72, %v78
    %vm82 = vcmask 58368
    %v83 = vsel %vm82, %v81, -inf
    %84 = vmax.xlane.f32.xlu0 %v83
    %v85 = vpop.xlane.xlu0 %84
    %v86 = vsub.f32 %v81, %v85
    %v87 = vmul.f32 %v86, 1.442695
    %v88 = vpow.pop %v87
    %v89 = vsel %vm82, %v88, 0.0
    %90 = vadd.xlane.f32.xlu0 %v89
    %v91 = vpop.xlane.xlu0 %90
    %v92 = vrcp.pop %v91
    %v93 = vmul.f32 %v88, %v92
    %94 = vst.msk [vmem:[#allocation5] sm:$0x3] %vm82, %v93
    // Predicated region
    $region18: #{tpu_custom_call.1} parent=1 // pred_check
      _
    $region19: #{tpu_custom_call.1} parent=1 // pred_check_branch
      %96 = sbr.rel (0) target = $region21
    $region20: #{tpu_custom_call.1} parent=1 // pred_region
      %s98 = ssub.s32 32, 32
      %99 = vsyncadd [#allocation4], %s98
      %s101 = sshll.u32 [#allocation5], 4
      %s102 = int_to_ptr.vmem [resolvable:$true] %s101
      %104 = dma.vmem_to_hbm [thread:$0]  %s102, 32, %s3, [#allocation4]
    $region21: #{tpu_custom_call.1} parent=1 // pred_fallthru
      _
    // Predicated region
    $region22: #{tpu_custom_call.1} parent=1 // pred_check
      _
    $region23: #{tpu_custom_call.1} parent=1 // pred_check_branch
      %106 = sbr.rel (0) target = $region25
    $region24: #{tpu_custom_call.1} parent=1 // pred_region
      %107 = dma.done [#allocation4], 32
    $region25: #{tpu_custom_call.1} parent=1 // pred_fallthru
      _
    %108 = vsyncpa [#allocation3], 1
    %109 = vsyncpa [#allocation4], 1

</llo_original>
